<compile_context>
chip_gen: v7x
topology: tpu7x:2x2x1
jax: 0.10.0
libtpu: 0.0.40
codegen_flags: <defaults>
</compile_context>

<pallas_src>
import functools

import jax
import jax.numpy as jnp
import numpy as np
from jax.experimental import pallas as pl
from jax.experimental.pallas import tpu as pltpu

SMOOTH = 1e-5


def _dice_partial_kernel(x_ref, t_ref, intersect_ref, ysum_ref, zsum_ref, *,
                         softmax):
    # x_ref:        (C, TILE_N) f32  — class-resident slab of logits/probs
    # t_ref:        (1, TILE_N) i8   — label map tile
    # intersect_ref (C, 1) f32       — per-class partial sums for this tile
    # ysum_ref      (C, 1) f32
    # zsum_ref      (C, 1) f32
    x = x_ref[...]

    if softmax:
        # Fused channel softmax (C is the sublane axis; C is small).
        m = jnp.max(x, axis=0, keepdims=True)
        e = jnp.exp(x - m)
        p = e / jnp.sum(e, axis=0, keepdims=True)
    else:
        p = x

    labels = t_ref[...].astype(jnp.int32)                       # (1, TILE_N)
    cls = jax.lax.broadcasted_iota(jnp.int32, p.shape, 0)       # (C, TILE_N)
    onehot = labels == cls                                      # (C, TILE_N) bool

    intersect_ref[...] = jnp.sum(jnp.where(onehot, p, 0.0),
                                 axis=1, keepdims=True)          # (C, 1)
    ysum_ref[...] = jnp.sum(onehot.astype(jnp.float32),
                            axis=1, keepdims=True)               # (C, 1)
    zsum_ref[...] = jnp.sum(p * p, axis=1, keepdims=True)        # (C, 1)


def _pick_tile_n(n, max_tile=4096):
    """Largest multiple-of-128 divisor of n, capped at max_tile; else full n."""
    if n % 128 == 0:
        t = min(max_tile, n)
        t -= t % 128
        while t >= 128:
            if n % t == 0:
                return t
            t -= 128
    return n  # full row is always a legal block (equals the array dim)


@functools.partial(jax.jit, static_argnames=("n_classes", "softmax"))
def dice_loss(inputs, target, weight=None, *, n_classes, softmax=False):
    """Pallas implementation of DiceLoss.forward.

    inputs : (B, C, H, W) float32 logits (softmax=True) or probabilities
    target : (B, H, W)    integer class indices in [0, n_classes)
    weight : (C,)         float32 per-class weights (None -> ones)
    returns scalar float32 loss
    """
    B, C, H, W = inputs.shape
    assert C == n_classes
    N = H * W

    x = inputs.reshape(B, C, N).astype(jnp.float32)       # metadata reshape
    # int8 labels: quarters target HBM traffic (assumes n_classes <= 127).
    t = target.reshape(B, 1, N).astype(jnp.int8)

    tile_n = _pick_tile_n(N)
    n_tiles = N // tile_n

    part_struct = jax.ShapeDtypeStruct((B, n_tiles, C, 1), jnp.float32)
    out_spec = pl.BlockSpec(
        (pl.Squeezed(), pl.Squeezed(), C, 1), lambda b, s: (b, s, 0, 0))

    intersect_p, ysum_p, zsum_p = pl.pallas_call(
        functools.partial(_dice_partial_kernel, softmax=softmax),
        out_shape=(part_struct, part_struct, part_struct),
        grid_spec=pltpu.PrefetchScalarGridSpec(
            num_scalar_prefetch=0,
            grid=(B, n_tiles),
            in_specs=[
                # class-resident, lane-dense slab of predictions
                pl.BlockSpec((pl.Squeezed(), C, tile_n), lambda b, s: (b, 0, s)),
                # matching label tile
                pl.BlockSpec((pl.Squeezed(), 1, tile_n), lambda b, s: (b, 0, s)),
            ],
            out_specs=[out_spec, out_spec, out_spec],
        ),
        compiler_params=pltpu.CompilerParams(
            # every grid step writes its own partial block -> fully parallel
            # (lets v7x shard spatial tiles across both TensorCores)
            dimension_semantics=("parallel", "parallel"),
        ),
    )(x, t)

    # Tiny (C,)-sized combine in plain JAX (matches the PyTorch per-class loop).
    intersect = jnp.sum(intersect_p, axis=(0, 1, 3))   # (C,)
    y_sum = jnp.sum(ysum_p, axis=(0, 1, 3))            # (C,)
    z_sum = jnp.sum(zsum_p, axis=(0, 1, 3))            # (C,)

    if weight is None:
        weight = jnp.ones((n_classes,), jnp.float32)
    dice = 1.0 - (2.0 * intersect + SMOOTH) / (z_sum + y_sum + SMOOTH)
    return jnp.sum(dice * weight.astype(jnp.float32)) / n_classes


def dice_loss_ref(inputs, target, weight, *, n_classes, softmax=False):
    """Pure-JAX reference mirroring the PyTorch module."""
    if softmax:
        inputs = jax.nn.softmax(inputs, axis=1)
    loss = 0.0
    for i in range(n_classes):
        score = inputs[:, i]
        t = (target == i).astype(jnp.float32)
        intersect = jnp.sum(score * t)
        y_sum = jnp.sum(t * t)
        z_sum = jnp.sum(score * score)
        dice = 1.0 - (2.0 * intersect + SMOOTH) / (z_sum + y_sum + SMOOTH)
        loss = loss + dice * weight[i]
    return loss / n_classes


if __name__ == "__main__":
    B, C, H, W = 2, 4, 16, 16
    key = jax.random.PRNGKey(0)
    k1, k2 = jax.random.split(key)

    logits = jax.random.normal(k1, (B, C, H, W), dtype=jnp.float32)
    target = jax.random.randint(k2, (B, H, W), 0, C, dtype=jnp.int32)
    weight = jnp.ones((C,), dtype=jnp.float32)  # matches weight=None default

    out = dice_loss(logits, target, weight, n_classes=C, softmax=True)
    out = jax.block_until_ready(out)

    ref = dice_loss_ref(logits, target, weight, n_classes=C, softmax=True)
    np.testing.assert_allclose(np.asarray(out), np.asarray(ref),
                               rtol=1e-5, atol=1e-6)

    print("KERNEL_OK")
</pallas_src>

<mosaic_0001>
module attributes {stable_mosaic.version = 11 : i64} {
  func.func @_dice_partial_kernel(%arg0: i32, %arg1: i32, %arg2: memref<1x4x256xf32, #tpu.memory_space<vmem>>, %arg3: memref<1x1x256xi8, #tpu.memory_space<vmem>>, %arg4: memref<1x1x4x1xf32, #tpu.memory_space<vmem>>, %arg5: memref<1x1x4x1xf32, #tpu.memory_space<vmem>>, %arg6: memref<1x1x4x1xf32, #tpu.memory_space<vmem>>) attributes {dimension_semantics = [#tpu.dimension_semantics<parallel>, #tpu.dimension_semantics<parallel>], iteration_bounds = array<i64: 2, 1>, scalar_prefetch = 0 : i64, scratch_operands = 0 : i64, tpu.core_type = #tpu.core_type<tc>, window_params = [{transform_indices = @transform_0, window_bounds = array<i64: 1, 4, 256>}, {transform_indices = @transform_1, window_bounds = array<i64: 1, 1, 256>}, {transform_indices = @transform_2, window_bounds = array<i64: 1, 1, 4, 1>}, {transform_indices = @transform_3, window_bounds = array<i64: 1, 1, 4, 1>}, {transform_indices = @transform_4, window_bounds = array<i64: 1, 1, 4, 1>}]} {
    %c0 = arith.constant 0 : index
    %c0_0 = arith.constant 0 : index
    %c0_1 = arith.constant 0 : index
    %0 = vector.load %arg2[%c0, %c0_0, %c0_1] : memref<1x4x256xf32, #tpu.memory_space<vmem>>, vector<1x4x256xf32>
    %1 = vector.shape_cast %0 : vector<1x4x256xf32> to vector<4x256xf32>
    %cst = arith.constant dense<0xFF800000> : vector<256xf32>
    %2 = vector.multi_reduction <maximumf>, %1, %cst [0] : vector<4x256xf32> to vector<256xf32>
    %3 = vector.shape_cast %2 : vector<256xf32> to vector<1x256xf32>
    %4 = vector.broadcast %3 : vector<1x256xf32> to vector<4x256xf32>
    %5 = arith.subf %1, %4 : vector<4x256xf32>
    %6 = math.exp %5 : vector<4x256xf32>
    %cst_2 = arith.constant dense<0.000000e+00> : vector<256xf32>
    %7 = vector.multi_reduction <add>, %6, %cst_2 [0] : vector<4x256xf32> to vector<256xf32>
    %8 = vector.shape_cast %7 : vector<256xf32> to vector<1x256xf32>
    %9 = vector.broadcast %8 : vector<1x256xf32> to vector<4x256xf32>
    %10 = arith.divf %6, %9 : vector<4x256xf32>
    %c0_3 = arith.constant 0 : index
    %c0_4 = arith.constant 0 : index
    %c0_5 = arith.constant 0 : index
    %11 = vector.load %arg3[%c0_3, %c0_4, %c0_5] : memref<1x1x256xi8, #tpu.memory_space<vmem>>, vector<1x1x256xi8>
    %12 = vector.shape_cast %11 : vector<1x1x256xi8> to vector<1x256xi8>
    %13 = arith.extsi %12 : vector<1x256xi8> to vector<1x256xi32>
    %14 = tpu.iota {dimensions = array<i32: 0>} : vector<4x256xi32>
    %15 = vector.broadcast %13 : vector<1x256xi32> to vector<4x256xi32>
    %16 = arith.cmpi eq, %15, %14 : vector<4x256xi32>
    %cst_6 = arith.constant 0.000000e+00 : f32
    %17 = vector.broadcast %cst_6 : f32 to vector<4x256xf32>
    %18 = arith.select %16, %10, %17 : vector<4x256xi1>, vector<4x256xf32>
    %cst_7 = arith.constant dense<0.000000e+00> : vector<4xf32>
    %19 = vector.multi_reduction <add>, %18, %cst_7 [1] : vector<4x256xf32> to vector<4xf32>
    %20 = vector.shape_cast %19 : vector<4xf32> to vector<4x1xf32>
    %c0_8 = arith.constant 0 : index
    %c0_9 = arith.constant 0 : index
    %c0_10 = arith.constant 0 : index
    %c0_11 = arith.constant 0 : index
    %21 = vector.load %arg4[%c0_8, %c0_9, %c0_10, %c0_11] : memref<1x1x4x1xf32, #tpu.memory_space<vmem>>, vector<1x1x4x1xf32>
    %22 = vector.shape_cast %21 : vector<1x1x4x1xf32> to vector<4x1xf32>
    %23 = vector.shape_cast %20 : vector<4x1xf32> to vector<1x1x4x1xf32>
    tpu.vector_store %arg4[%c0_8, %c0_9, %c0_10, %c0_11], %23 {strides = array<i32>} : memref<1x1x4x1xf32, #tpu.memory_space<vmem>>, vector<1x1x4x1xf32>,
    %24 = arith.extui %16 : vector<4x256xi1> to vector<4x256xi32>
    %25 = arith.sitofp %24 : vector<4x256xi32> to vector<4x256xf32>
    %cst_12 = arith.constant dense<0.000000e+00> : vector<4xf32>
    %26 = vector.multi_reduction <add>, %25, %cst_12 [1] : vector<4x256xf32> to vector<4xf32>
    %27 = vector.shape_cast %26 : vector<4xf32> to vector<4x1xf32>
    %c0_13 = arith.constant 0 : index
    %c0_14 = arith.constant 0 : index
    %c0_15 = arith.constant 0 : index
    %c0_16 = arith.constant 0 : index
    %28 = vector.load %arg5[%c0_13, %c0_14, %c0_15, %c0_16] : memref<1x1x4x1xf32, #tpu.memory_space<vmem>>, vector<1x1x4x1xf32>
    %29 = vector.shape_cast %28 : vector<1x1x4x1xf32> to vector<4x1xf32>
    %30 = vector.shape_cast %27 : vector<4x1xf32> to vector<1x1x4x1xf32>
    tpu.vector_store %arg5[%c0_13, %c0_14, %c0_15, %c0_16], %30 {strides = array<i32>} : memref<1x1x4x1xf32, #tpu.memory_space<vmem>>, vector<1x1x4x1xf32>,
    %31 = arith.mulf %10, %10 : vector<4x256xf32>
    %cst_17 = arith.constant dense<0.000000e+00> : vector<4xf32>
    %32 = vector.multi_reduction <add>, %31, %cst_17 [1] : vector<4x256xf32> to vector<4xf32>
    %33 = vector.shape_cast %32 : vector<4xf32> to vector<4x1xf32>
    %c0_18 = arith.constant 0 : index
    %c0_19 = arith.constant 0 : index
    %c0_20 = arith.constant 0 : index
    %c0_21 = arith.constant 0 : index
    %34 = vector.load %arg6[%c0_18, %c0_19, %c0_20, %c0_21] : memref<1x1x4x1xf32, #tpu.memory_space<vmem>>, vector<1x1x4x1xf32>
    %35 = vector.shape_cast %34 : vector<1x1x4x1xf32> to vector<4x1xf32>
    %36 = vector.shape_cast %33 : vector<4x1xf32> to vector<1x1x4x1xf32>
    tpu.vector_store %arg6[%c0_18, %c0_19, %c0_20, %c0_21], %36 {strides = array<i32>} : memref<1x1x4x1xf32, #tpu.memory_space<vmem>>, vector<1x1x4x1xf32>,
    return
  }
  func.func @transform_0(%arg0: i32, %arg1: i32) -> (i32, i32, i32) {
    %c0_i32 = arith.constant 0 : i32
    %c0_i32_0 = arith.constant 0 : i32
    return %arg0, %c0_i32, %arg1 : i32, i32, i32
  }
  func.func @transform_1(%arg0: i32, %arg1: i32) -> (i32, i32, i32) {
    %c0_i32 = arith.constant 0 : i32
    %c0_i32_0 = arith.constant 0 : i32
    return %arg0, %c0_i32, %arg1 : i32, i32, i32
  }
  func.func @transform_2(%arg0: i32, %arg1: i32) -> (i32, i32, i32, i32) {
    %c0_i32 = arith.constant 0 : i32
    %c0_i32_0 = arith.constant 0 : i32
    %c0_i32_1 = arith.constant 0 : i32
    return %arg0, %arg1, %c0_i32, %c0_i32_0 : i32, i32, i32, i32
  }
  func.func @transform_3(%arg0: i32, %arg1: i32) -> (i32, i32, i32, i32) {
    %c0_i32 = arith.constant 0 : i32
    %c0_i32_0 = arith.constant 0 : i32
    %c0_i32_1 = arith.constant 0 : i32
    return %arg0, %arg1, %c0_i32, %c0_i32_0 : i32, i32, i32, i32
  }
  func.func @transform_4(%arg0: i32, %arg1: i32) -> (i32, i32, i32, i32) {
    %c0_i32 = arith.constant 0 : i32
    %c0_i32_0 = arith.constant 0 : i32
    %c0_i32_1 = arith.constant 0 : i32
    return %arg0, %arg1, %c0_i32, %c0_i32_0 : i32, i32, i32, i32
  }
}

</mosaic_0001>

<llo_original>
// kernel: dice_loss.1
$region0: #{dice_loss.1}
  #allocation0 [shape = 'u32[]', space=smem, size = 0x4, offset = 0x4, fixed_abs, tag = 'smem constant byte address 0x4 - core index']
  #allocation1 [shape = 'u32[144,128]{1,0:T(1,128)}', space=vmem, size = 0x12000, scoped, tag = 'internal scratch']
  %s0 = inlined_call_operand.vmem [shape: f32[2,4,256], index: 0, kind: input, shape index: {}]
  %s1 = inlined_call_operand.vmem [shape: s8[2,1,256], index: 1, kind: input, shape index: {}]
  %s2 = inlined_call_operand.vmem [shape: f32[2,1,4,1], index: 2, kind: output, shape index: {0}]
  %s3 = inlined_call_operand.vmem [shape: f32[2,1,4,1], index: 3, kind: output, shape index: {1}]
  %s4 = inlined_call_operand.vmem [shape: f32[2,1,4,1], index: 4, kind: output, shape index: {2}]
  %5 = xla_tuple %s2, %s3, %s4
  %s6 = sld [smem:[#allocation0]]
  $region57: #{dice_loss.1} parent=0
    _
  %s8 = ssub.s32 1, %s6
  %s9 = scalar_select 0, %s8, %s6
  loop: start=0, step=1, limit=4
  $region2: #{dice_loss.1} parent=0 // loop_pre_header
    _
  $region3: #{dice_loss.1} parent=0 // loop_header
    %s11 = sphi 0, %s15
    %p12 = scmp.ge.s32.totalorder %s11, 4
    %s18 = sphi 0, %s30
    %s19 = sphi 0, %s26
    %s20 = sphi 0, %s18
    %s21 = sphi 0, %s19
    %s22 = sphi 0, %s20
    %s23 = sphi 0, %s21
    %s35 = sphi 0, %s37
    %s38 = sphi 0, %s35
    %s39 = sphi 0, %s38
    %s55 = sphi 0, %s39
    %s63 = sphi 0, %s65
    %s66 = sphi 0, %s63
    %s67 = sphi 0, %s66
    %s83 = sphi 0, %s67
    %s91 = sphi 0, %s93
    %s94 = sphi 0, %s91
    %s95 = sphi 0, %s94
    %s111 = sphi 0, %s95
    %s119 = sphi 0, %s121
    %s122 = sphi 0, %s119
    %s123 = sphi 0, %s122
    %s139 = sphi 0, %s123
    %s147 = sphi 0, %s149
    %s150 = sphi 0, %s147
    %s151 = sphi 0, %s150
    %s167 = sphi 0, %s151
  $region4: #{dice_loss.1} parent=0 // loop_header_branch
    %14 = sbr.rel (%p12) target = $region8
  $region5: #{dice_loss.1} parent=0 // loop_body
    %s16 = ssub.s32 %s11, 1
    %s17 = ssub.s32 %s11, 2
    %s24 = sadd.s32 1, %s19
    %p25 = scmp.ge.s32.totalorder %s24, 1
    %s26 = scalar_select %p25, 0, %s24
    %s27 = sadd.s32 1, %s18
    %s28 = scalar_select %p25, %s27, %s18
    %p29 = scmp.ge.s32.totalorder %s28, 2
    %s30 = scalar_select %p29, 0, %s28
    %s31 = ssub.s32 %s18, %s30
    %s32 = ssub.s32 %s19, %s26
    %s33 = sor.u32 %s31, %s32
    %p34 = scmp.eq.s32.totalorder %s33, 0
    %s36 = sadd.s32 %s35, 1
    %s37 = scalar_select %p34, %s35, %s36
    %p40 = pneg %p34
    %p41 = scmp.eq.s32.totalorder %s11, 1
    %p42 = por %p40, %p41
    %p43 = scmp.ne.s32.totalorder %s35, %s38
    %p44 = scmp.eq.s32.totalorder %s11, 0
    %p45 = por %p43, %p44
    %p46 = scmp.ne.s32.totalorder %s35, %s38
    %p47 = scmp.eq.s32.totalorder %s16, 1
    %p48 = por %p46, %p47
    %p49 = scmp.ne.s32.totalorder %s38, %s39
    %p50 = scmp.eq.s32.totalorder %s16, 0
    %p51 = por %p49, %p50
    %p52 = scmp.ne.s32.totalorder %s38, %s39
    %p53 = scmp.eq.s32.totalorder %s17, 1
    %p54 = por %p52, %p53
    %p56 = scmp.ne.s32.totalorder %s39, %s55
    %p57 = scmp.eq.s32.totalorder %s17, 0
    %p58 = por %p56, %p57
    %s59 = ssub.s32 %s18, %s30
    %s60 = ssub.s32 %s19, %s26
    %s61 = sor.u32 %s59, %s60
    %p62 = scmp.eq.s32.totalorder %s61, 0
    %s64 = sadd.s32 %s63, 1
    %s65 = scalar_select %p62, %s63, %s64
    %p68 = pneg %p62
    %p69 = scmp.eq.s32.totalorder %s11, 1
    %p70 = por %p68, %p69
    %p71 = scmp.ne.s32.totalorder %s63, %s66
    %p72 = scmp.eq.s32.totalorder %s11, 0
    %p73 = por %p71, %p72
    %p74 = scmp.ne.s32.totalorder %s63, %s66
    %p75 = scmp.eq.s32.totalorder %s16, 1
    %p76 = por %p74, %p75
    %p77 = scmp.ne.s32.totalorder %s66, %s67
    %p78 = scmp.eq.s32.totalorder %s16, 0
    %p79 = por %p77, %p78
    %p80 = scmp.ne.s32.totalorder %s66, %s67
    %p81 = scmp.eq.s32.totalorder %s17, 1
    %p82 = por %p80, %p81
    %p84 = scmp.ne.s32.totalorder %s67, %s83
    %p85 = scmp.eq.s32.totalorder %s17, 0
    %p86 = por %p84, %p85
    %s87 = ssub.s32 %s18, %s30
    %s88 = ssub.s32 %s19, %s26
    %s89 = sor.u32 %s87, %s88
    %p90 = scmp.eq.s32.totalorder %s89, 0
    %s92 = sadd.s32 %s91, 1
    %s93 = scalar_select %p90, %s91, %s92
    %p96 = pneg %p90
    %p97 = scmp.eq.s32.totalorder %s11, 1
    %p98 = por %p96, %p97
    %p99 = scmp.ne.s32.totalorder %s91, %s94
    %p100 = scmp.eq.s32.totalorder %s11, 0
    %p101 = por %p99, %p100
    %p102 = scmp.ne.s32.totalorder %s91, %s94
    %p103 = scmp.eq.s32.totalorder %s16, 1
    %p104 = por %p102, %p103
    %p105 = scmp.ne.s32.totalorder %s94, %s95
    %p106 = scmp.eq.s32.totalorder %s16, 0
    %p107 = por %p105, %p106
    %p108 = scmp.ne.s32.totalorder %s94, %s95
    %p109 = scmp.eq.s32.totalorder %s17, 1
    %p110 = por %p108, %p109
    %p112 = scmp.ne.s32.totalorder %s95, %s111
    %p113 = scmp.eq.s32.totalorder %s17, 0
    %p114 = por %p112, %p113
    %s115 = ssub.s32 %s18, %s30
    %s116 = ssub.s32 %s19, %s26
    %s117 = sor.u32 %s115, %s116
    %p118 = scmp.eq.s32.totalorder %s117, 0
    %s120 = sadd.s32 %s119, 1
    %s121 = scalar_select %p118, %s119, %s120
    %p124 = pneg %p118
    %p125 = scmp.eq.s32.totalorder %s11, 1
    %p126 = por %p124, %p125
    %p127 = scmp.ne.s32.totalorder %s119, %s122
    %p128 = scmp.eq.s32.totalorder %s11, 0
    %p129 = por %p127, %p128
    %p130 = scmp.ne.s32.totalorder %s119, %s122
    %p131 = scmp.eq.s32.totalorder %s16, 1
    %p132 = por %p130, %p131
    %p133 = scmp.ne.s32.totalorder %s122, %s123
    %p134 = scmp.eq.s32.totalorder %s16, 0
    %p135 = por %p133, %p134
    %p136 = scmp.ne.s32.totalorder %s122, %s123
    %p137 = scmp.eq.s32.totalorder %s17, 1
    %p138 = por %p136, %p137
    %p140 = scmp.ne.s32.totalorder %s123, %s139
    %p141 = scmp.eq.s32.totalorder %s17, 0
    %p142 = por %p140, %p141
    %s143 = ssub.s32 %s18, %s30
    %s144 = ssub.s32 %s19, %s26
    %s145 = sor.u32 %s143, %s144
    %p146 = scmp.eq.s32.totalorder %s145, 0
    %s148 = sadd.s32 %s147, 1
    %s149 = scalar_select %p146, %s147, %s148
    %p152 = pneg %p146
    %p153 = scmp.eq.s32.totalorder %s11, 1
    %p154 = por %p152, %p153
    %p155 = scmp.ne.s32.totalorder %s147, %s150
    %p156 = scmp.eq.s32.totalorder %s11, 0
    %p157 = por %p155, %p156
    %p158 = scmp.ne.s32.totalorder %s147, %s150
    %p159 = scmp.eq.s32.totalorder %s16, 1
    %p160 = por %p158, %p159
    %p161 = scmp.ne.s32.totalorder %s150, %s151
    %p162 = scmp.eq.s32.totalorder %s16, 0
    %p163 = por %p161, %p162
    %p164 = scmp.ne.s32.totalorder %s150, %s151
    %p165 = scmp.eq.s32.totalorder %s17, 1
    %p166 = por %p164, %p165
    %p168 = scmp.ne.s32.totalorder %s151, %s167
    %p169 = scmp.eq.s32.totalorder %s17, 0
    %p170 = por %p168, %p169
    %p171 = scmp.le.s32.totalorder 1, %s11
    %p172 = scmp.lt.s32.totalorder %s11, 3
    %p173 = pnand %p171, %p172
    %p174 = pneg %p173
    // Predicated region
    $region9: #{dice_loss.1} parent=5 // pred_check
      _
    $region10: #{dice_loss.1} parent=5 // pred_check_branch
      %176 = sbr.rel (%p173) target = $region12
    $region11: #{dice_loss.1} parent=5 // pred_region
      %s177 = ssub.s32 %s11, 1
    $region12: #{dice_loss.1} parent=5 // pred_fallthru
      _
    %p178 = scmp.lt.s32.totalorder %s11, 2
    // Predicated region
    $region13: #{dice_loss.1} parent=5 // pred_check
      %p179 = pneg %p178
    $region14: #{dice_loss.1} parent=5 // pred_check_branch
      %181 = sbr.rel (%p179) target = $region16
    $region15: #{dice_loss.1} parent=5 // pred_region
      // Predicated region
      $region17: #{dice_loss.1} parent=15 // pred_check
        %p182 = pneg %p45
      $region18: #{dice_loss.1} parent=15 // pred_check_branch
        %184 = sbr.rel (%p182) target = $region20
      $region19: #{dice_loss.1} parent=15 // pred_region
        %s185 = smul.u32 2, %s19
        %p186 = scmp.lt.s32.totalorder %s18, 1
        %s187 = scalar_select %p186, %s18, 1
        %p188 = scmp.lt.s32.totalorder %s185, 1
        %s189 = scalar_select %p188, %s185, 1
        %s190 = smul.addr %s187, 2
        %s191 = sadd.s32 %s189, %s190
        %s192 = smul.addr %s191, 4
        %s193 = scalar_lea.vmem %s0, %s192
        %s194 = smul.u32 2, %s19
      $region20: #{dice_loss.1} parent=15 // pred_fallthru
        _
      // Predicated region
      $region21: #{dice_loss.1} parent=15 // pred_check
        %p195 = pneg %p73
      $region22: #{dice_loss.1} parent=15 // pred_check_branch
        %197 = sbr.rel (%p195) target = $region24
      $region23: #{dice_loss.1} parent=15 // pred_region
        %s198 = smul.u32 2, %s19
        %p199 = scmp.lt.s32.totalorder %s18, 1
        %s200 = scalar_select %p199, %s18, 1
        %p201 = scmp.lt.s32.totalorder %s198, 1
        %s202 = scalar_select %p201, %s198, 1
        %s203 = smul.addr %s200, 2
        %s204 = sadd.s32 %s202, %s203
        %s205 = scalar_lea.vmem %s1, %s204
        %s206 = smul.u32 2, %s19
      $region24: #{dice_loss.1} parent=15 // pred_fallthru
        _
    $region16: #{dice_loss.1} parent=5 // pred_fallthru
      _
    %p207 = scmp.le.s32.totalorder 1, %s11
    %p208 = scmp.lt.s32.totalorder %s11, 3
    %p209 = pnand %p207, %p208
    %p210 = pneg %p209
    // Predicated region
    $region25: #{dice_loss.1} parent=5 // pred_check
      _
    $region26: #{dice_loss.1} parent=5 // pred_check_branch
      %212 = sbr.rel (%p209) target = $region28
    $region27: #{dice_loss.1} parent=5 // pred_region
      %s213 = ssub.s32 %s11, 1
      %s214 = smul.u32 2, %s21
      %p215 = scmp.lt.s32.totalorder %s20, 1
      %s216 = scalar_select %p215, %s20, 1
      %p217 = scmp.lt.s32.totalorder %s214, 1
      %s218 = scalar_select %p217, %s214, 1
      %s219 = smul.addr %s216, 2
      %s220 = sadd.s32 %s218, %s219
      %s221 = smul.addr %s220, 4
      %s222 = scalar_lea.vmem %s0, %s221
      %p223 = pneg %p51
      %p224 = pneg %p48
      %s225 = smul.u32 2, %s21
      %p226 = scmp.lt.s32.totalorder %s20, 1
      %s227 = scalar_select %p226, %s20, 1
      %p228 = scmp.lt.s32.totalorder %s225, 1
      %s229 = scalar_select %p228, %s225, 1
      %s230 = smul.addr %s227, 2
      %s231 = sadd.s32 %s229, %s230
      %s232 = scalar_lea.vmem %s1, %s231
      %p233 = pneg %p79
      %p234 = pneg %p76
      %p235 = pneg %p107
      %p236 = pneg %p104
      %p237 = scmp.lt.s32.totalorder %s20, 1
      %s238 = scalar_select %p237, %s20, 1
      %p239 = scmp.lt.s32.totalorder %s21, 0
      %s240 = scalar_select %p239, %s21, 0
      %s241 = sadd.s32 %s240, %s238
      %s242 = smul.addr %s241, 4
      %s243 = scalar_lea.vmem %s2, %s242
      %p244 = pneg %p135
      %p245 = pneg %p132
      %p246 = scmp.lt.s32.totalorder %s20, 1
      %s247 = scalar_select %p246, %s20, 1
      %p248 = scmp.lt.s32.totalorder %s21, 0
      %s249 = scalar_select %p248, %s21, 0
      %s250 = sadd.s32 %s249, %s247
      %s251 = smul.addr %s250, 4
      %s252 = scalar_lea.vmem %s3, %s251
      %p253 = pneg %p163
      %p254 = pneg %p160
      %p255 = scmp.lt.s32.totalorder %s20, 1
      %s256 = scalar_select %p255, %s20, 1
      %p257 = scmp.lt.s32.totalorder %s21, 0
      %s258 = scalar_select %p257, %s21, 0
      %s259 = sadd.s32 %s258, %s256
      %s260 = smul.addr %s259, 4
      %s261 = scalar_lea.vmem %s4, %s260
      %s262 = smul.u32 2, %s21
      %p263 = scmp.lt.s32.totalorder %s20, 1
      %s264 = scalar_select %p263, %s20, 1
      %p265 = scmp.lt.s32.totalorder %s262, 1
      %s266 = scalar_select %p265, %s262, 1
      %s267 = smul.addr %s264, 2
      %s268 = sadd.s32 %s266, %s267
      %s269 = smul.addr %s268, 4
      %s270 = scalar_lea.vmem %s0, %s269
      %s271 = smul.u32 2, %s21
      %s272 = smul.u32 2, %s21
      %p273 = scmp.lt.s32.totalorder %s20, 1
      %s274 = scalar_select %p273, %s20, 1
      %p275 = scmp.lt.s32.totalorder %s272, 1
      %s276 = scalar_select %p275, %s272, 1
      %s277 = smul.addr %s274, 2
      %s278 = sadd.s32 %s276, %s277
      %s279 = scalar_lea.vmem %s1, %s278
      %s280 = smul.u32 2, %s21
      %p281 = scmp.lt.s32.totalorder %s20, 1
      %s282 = scalar_select %p281, %s20, 1
      %p283 = scmp.lt.s32.totalorder %s21, 0
      %s284 = scalar_select %p283, %s21, 0
      %s285 = sadd.s32 %s284, %s282
      %s286 = smul.addr %s285, 4
      %s287 = scalar_lea.vmem %s2, %s286
      %p288 = scmp.lt.s32.totalorder %s20, 1
      %s289 = scalar_select %p288, %s20, 1
      %p290 = scmp.lt.s32.totalorder %s21, 0
      %s291 = scalar_select %p290, %s21, 0
      %s292 = sadd.s32 %s291, %s289
      %s293 = smul.addr %s292, 4
      %s294 = scalar_lea.vmem %s3, %s293
      %p295 = scmp.lt.s32.totalorder %s20, 1
      %s296 = scalar_select %p295, %s20, 1
      %p297 = scmp.lt.s32.totalorder %s21, 0
      %s298 = scalar_select %p297, %s21, 0
      %s299 = sadd.s32 %s298, %s296
      %s300 = smul.addr %s299, 4
      %s301 = scalar_lea.vmem %s4, %s300
      %v302 = vld [vmem:[%s270] sm:$0xff]
      %v304 = vcombine.high %v302, %v302
      %vm306 = vcmask 1043456
      %v307 = vsel %vm306, %v302, -inf
      %v308 = vrot.slane %v307, 4
      %v309 = vmax.f32 %v307, %v308
      %v310 = vrot.slane %v309, 2
      %v311 = vmax.f32 %v309, %v310
      %v312 = vrot.slane %v311, 1
      %v313 = vmax.f32 %v311, %v312
      %v314 = vsel %vm306, %v304, -inf
      %v315 = vrot.slane %v314, 4
      %v316 = vmax.f32 %v314, %v315
      %v317 = vrot.slane %v316, 2
      %v318 = vmax.f32 %v316, %v317
      %v319 = vrot.slane %v318, 1
      %v320 = vmax.f32 %v318, %v319
      %v323 = vcombine.low %v313, %v320
      %v325 = vsub.f32 %v302, %v323
      %v326 = vmul.f32 %v325, 1.442695
      %v327 = vpow.pop %v326
      %v329 = vcombine.high %v327, %v327
      %v331 = vsel %vm306, %v327, 0.0
      %v332 = vrot.slane %v331, 4
      %v333 = vadd.f32 %v331, %v332
      %v334 = vrot.slane %v333, 2
      %v335 = vadd.f32 %v333, %v334
      %v336 = vrot.slane %v335, 1
      %v337 = vadd.f32 %v335, %v336
      %v338 = vsel %vm306, %v329, 0.0
      %v339 = vrot.slane %v338, 4
      %v340 = vadd.f32 %v338, %v339
      %v341 = vrot.slane %v340, 2
      %v342 = vadd.f32 %v340, %v341
      %v343 = vrot.slane %v342, 1
      %v344 = vadd.f32 %v342, %v343
      %v347 = vcombine.low %v337, %v344
      %v349 = vrcp.pop %v347
      %v350 = vmul.f32 %v327, %v349
      %v351 = vld [vmem:[%s279] sm:$0x3]
      %v352 = vunpack.c.0.s8 %v351
      %v353 = vlaneseq
      %v354 = vshrl.u32 %v353, 7
      %v355 = vlaneseq
      %v356 = vshrl.u32 %v355, 7
      %v357 = vsub.s32 0, %v356
      %v358 = vrot.slane %v352, %v357
      %v359 = vlaneseq
      %v360 = vshrl.u32 %v359, 7
      %v361 = vsub.s32 4, %v360
      %v362 = vrot.slane %v352, %v361
      %v363 = vlaneseq
      %v364 = vshrl.u32 %v363, 7
      %v365 = vsub.s32 0, %v364
      %v366 = vrot.slane %v358, %v365
      %v367 = vlaneseq
      %v368 = vshrl.u32 %v367, 7
      %v369 = vsub.s32 0, %v368
      %v370 = vrot.slane %v362, %v369
      %vm371 = vcmp.eq.s32.totalorder %v366, %v354
      %vm372 = vcmp.eq.s32.totalorder %v370, %v354
      %v374 = vcombine.high %v350, %v350
      %v376 = vsel %vm371, %v350, 0.0
      %v377 = vsel %vm372, %v374, 0.0
      %v378 = vsel %vm306, %v376, 0.0
      %v379 = vsel %vm306, %v377, 0.0
      %v380 = vadd.f32 %v378, %v379
      %381 = vadd.xlane.f32.xlu0 %v380
      %v382 = vpop.xlane.xlu0 %381
      %vm383 = vcmask 3072
      %384 = vst.msk [vmem:[%s287] sm:$0xf] %vm383, %v382
      %v385 = vsel %vm371, 1, 0
      %v386 = vsel %vm372, 1, 0
      %v387 = vcvt.s32.f32 %v385
      %v388 = vcvt.s32.f32 %v386
      %v389 = vsel %vm306, %v387, 0.0
      %v390 = vsel %vm306, %v388, 0.0
      %v391 = vadd.f32 %v389, %v390
      %392 = vadd.xlane.f32.xlu0 %v391
      %v393 = vpop.xlane.xlu0 %392
      %394 = vst.msk [vmem:[%s294] sm:$0xf] %vm383, %v393
      %v395 = vmul.f32 %v350, %v350
      %v397 = vcombine.high %v395, %v395
      %v399 = vsel %vm306, %v395, 0.0
      %v400 = vsel %vm306, %v397, 0.0
      %v401 = vadd.f32 %v399, %v400
      %402 = vadd.xlane.f32.xlu0 %v401
      %v403 = vpop.xlane.xlu0 %402
      %404 = vst.msk [vmem:[%s301] sm:$0xf] %vm383, %v403
      %p405 = scmp.lt.s32.totalorder %s20, 1
      %s406 = scalar_select %p405, %s20, 1
      %p407 = scmp.lt.s32.totalorder %s21, 0
      %s408 = scalar_select %p407, %s21, 0
      %s409 = sadd.s32 %s408, %s406
      %s410 = smul.addr %s409, 4
      %s411 = scalar_lea.vmem %s2, %s410
      %p412 = scmp.lt.s32.totalorder %s20, 1
      %s413 = scalar_select %p412, %s20, 1
      %p414 = scmp.lt.s32.totalorder %s21, 0
      %s415 = scalar_select %p414, %s21, 0
      %s416 = sadd.s32 %s415, %s413
      %s417 = smul.addr %s416, 4
      %s418 = scalar_lea.vmem %s3, %s417
      %p419 = scmp.lt.s32.totalorder %s20, 1
      %s420 = scalar_select %p419, %s20, 1
      %p421 = scmp.lt.s32.totalorder %s21, 0
      %s422 = scalar_select %p421, %s21, 0
      %s423 = sadd.s32 %s422, %s420
      %s424 = smul.addr %s423, 4
      %s425 = scalar_lea.vmem %s4, %s424
      // Predicated region
      $region29: #{dice_loss.1} parent=27 // pred_check
        %p426 = pneg %p104
      $region30: #{dice_loss.1} parent=27 // pred_check_branch
        %428 = sbr.rel (%p426) target = $region32
      $region31: #{dice_loss.1} parent=27 // pred_region
        _
      $region32: #{dice_loss.1} parent=27 // pred_fallthru
        _
      // Predicated region
      $region33: #{dice_loss.1} parent=27 // pred_check
        %p429 = pneg %p132
      $region34: #{dice_loss.1} parent=27 // pred_check_branch
        %431 = sbr.rel (%p429) target = $region36
      $region35: #{dice_loss.1} parent=27 // pred_region
        _
      $region36: #{dice_loss.1} parent=27 // pred_fallthru
        _
      // Predicated region
      $region37: #{dice_loss.1} parent=27 // pred_check
        %p432 = pneg %p160
      $region38: #{dice_loss.1} parent=27 // pred_check_branch
        %434 = sbr.rel (%p432) target = $region40
      $region39: #{dice_loss.1} parent=27 // pred_region
        _
      $region40: #{dice_loss.1} parent=27 // pred_fallthru
        _
    $region28: #{dice_loss.1} parent=5 // pred_fallthru
      _
    %p435 = scmp.le.s32.totalorder 2, %s11
    // Predicated region
    $region41: #{dice_loss.1} parent=5 // pred_check
      %p436 = pneg %p435
    $region42: #{dice_loss.1} parent=5 // pred_check_branch
      %438 = sbr.rel (%p436) target = $region44
    $region43: #{dice_loss.1} parent=5 // pred_region
      %s439 = ssub.s32 %s11, 2
      // Predicated region
      $region45: #{dice_loss.1} parent=43 // pred_check
        %p440 = pneg %p110
      $region46: #{dice_loss.1} parent=43 // pred_check_branch
        %442 = sbr.rel (%p440) target = $region48
      $region47: #{dice_loss.1} parent=43 // pred_region
        %p443 = scmp.lt.s32.totalorder %s22, 1
        %s444 = scalar_select %p443, %s22, 1
        %p445 = scmp.lt.s32.totalorder %s23, 0
        %s446 = scalar_select %p445, %s23, 0
        %s447 = sadd.s32 %s446, %s444
        %s448 = smul.addr %s447, 4
        %s449 = scalar_lea.vmem %s2, %s448
      $region48: #{dice_loss.1} parent=43 // pred_fallthru
        _
      // Predicated region
      $region49: #{dice_loss.1} parent=43 // pred_check
        %p450 = pneg %p138
      $region50: #{dice_loss.1} parent=43 // pred_check_branch
        %452 = sbr.rel (%p450) target = $region52
      $region51: #{dice_loss.1} parent=43 // pred_region
        %p453 = scmp.lt.s32.totalorder %s22, 1
        %s454 = scalar_select %p453, %s22, 1
        %p455 = scmp.lt.s32.totalorder %s23, 0
        %s456 = scalar_select %p455, %s23, 0
        %s457 = sadd.s32 %s456, %s454
        %s458 = smul.addr %s457, 4
        %s459 = scalar_lea.vmem %s3, %s458
      $region52: #{dice_loss.1} parent=43 // pred_fallthru
        _
      // Predicated region
      $region53: #{dice_loss.1} parent=43 // pred_check
        %p460 = pneg %p166
      $region54: #{dice_loss.1} parent=43 // pred_check_branch
        %462 = sbr.rel (%p460) target = $region56
      $region55: #{dice_loss.1} parent=43 // pred_region
        %p463 = scmp.lt.s32.totalorder %s22, 1
        %s464 = scalar_select %p463, %s22, 1
        %p465 = scmp.lt.s32.totalorder %s23, 0
        %s466 = scalar_select %p465, %s23, 0
        %s467 = sadd.s32 %s466, %s464
        %s468 = smul.addr %s467, 4
        %s469 = scalar_lea.vmem %s4, %s468
      $region56: #{dice_loss.1} parent=43 // pred_fallthru
        _
    $region44: #{dice_loss.1} parent=5 // pred_fallthru
      _
  $region6: #{dice_loss.1} parent=0 // loop_footer
    %s15 = sadd.s32 1, %s11
  $region7: #{dice_loss.1} parent=0 // loop_footer_branch
    %10 = sbr.rel target = $region3
  $region8: #{dice_loss.1} parent=0 // loop_exit
    _

</llo_original>
